<compile_context>
chip_gen: v7x
topology: tpu7x:2x2x1
jax: 0.10.0
libtpu: 0.0.40
codegen_flags: <defaults>
</compile_context>

<pallas_src>
import functools

import jax
import jax.numpy as jnp
from jax.experimental import pallas as pl
from jax.experimental.pallas import tpu as pltpu

_LANES = 128
_MAX_COLS = 8192          # lane-dense last-dim cap (multiple of 128)
_TINY_BYTES = 1 << 20     # below this, a pallas_call is pure launch overhead


def _swish_kernel(x_ref, o_ref):
    xf = x_ref[...].astype(jnp.float32)  # exact f32 sigmoid on every generation
    o_ref[...] = (xf * jax.nn.sigmoid(xf)).astype(o_ref.dtype)


def _swish_jnp(x):
    xf = x.astype(jnp.float32)
    return (xf * jax.nn.sigmoid(xf)).astype(x.dtype)


def _sublane_multiple(dtype) -> int:
    # Native packed-sublane tile: 8 rows for 32-bit, 16 for 16-bit, 32 for 8-bit.
    bits = jnp.dtype(dtype).itemsize * 8
    return max(8, 256 // bits)


@functools.cache
def _tpu_params():
    """(vmem_limit_bytes, target_block_bytes, num_tensorcores) per generation."""
    vmem_physical = 128 << 20
    num_cores = 1
    try:
        info = pltpu.get_tpu_info()
        vmem_physical = int(
            getattr(info, "vmem_capacity_bytes", vmem_physical) or vmem_physical)
        for attr in ("num_tensorcores", "tensorcores_per_chip", "num_cores"):
            v = getattr(info, attr, None)
            if v:
                num_cores = int(v)
                break
    except Exception:  # info query unavailable -> safe v5e/v6e defaults
        pass
    if vmem_physical <= (64 << 20):
        # v7x-class: 64 MiB VMEM per TC, 2 TCs sharing ~3.2 TB/s HBM.
        return 44 << 20, 2 << 20, max(num_cores, 2)
    # v5e / v6e: 128 MiB VMEM, 1 TensorCore.
    return 64 << 20, 6 << 20, num_cores


def _factorize_aligned(n_main: int, sub: int):
    """rows * cols == n_main with cols % 128 == 0 and rows % sub == 0."""
    m = n_main // (sub * _LANES)
    for g in range(min(m, _MAX_COLS // _LANES), 0, -1):
        if m % g == 0:
            return (m // g) * sub, g * _LANES
    return m * sub, _LANES  # unreachable: g == 1 always divides m


def _pick_row_tile(rows: int, cols: int, itemsize: int, sub: int,
                   vmem_limit: int, target_block: int, num_cores: int) -> int:
    """Largest multiple-of-`sub` divisor of `rows` within the block budget."""
    bytes_per_row = cols * itemsize
    # Resident footprint ~= 2 buffers x (input + output) = 4 x block (+slack).
    vmem_cap = max(1, (vmem_limit // 5) // bytes_per_row)
    want = max(sub, min(rows, target_block // bytes_per_row, vmem_cap))
    if num_cores > 1:
        # Keep >= 2 grid steps per TensorCore so megacore sharding has work.
        per_core = (rows // (2 * num_cores)) // sub * sub
        if per_core >= sub:
            want = min(want, per_core)
    if rows <= want:
        return rows  # single block == full array dims
    t = max(sub, (want // sub) * sub)
    while t >= sub:
        if rows % t == 0:
            return t
        t -= sub
    return sub  # rows % sub == 0 by construction, so `sub` always divides


def swish(x: jax.Array, *, force_pallas: bool = False) -> jax.Array:
    """Elementwise swish: x * sigmoid(x). Matches torch semantics."""
    orig_shape = x.shape
    dtype = x.dtype
    n = x.size
    itemsize = jnp.dtype(dtype).itemsize
    sub = _sublane_multiple(dtype)
    unit = sub * _LANES

    # Tiny inputs: fused XLA elementwise beats kernel launch / DMA setup.
    if n * itemsize < _TINY_BYTES and not force_pallas:
        return _swish_jnp(x)

    n_main = (n // unit) * unit  # aligned prefix, multiple of sub*128
    if n_main == 0:
        return _swish_jnp(x)

    vmem_limit, target_block, num_cores = _tpu_params()
    rows, cols = _factorize_aligned(n_main, sub)
    tr = _pick_row_tile(rows, cols, itemsize, sub, vmem_limit, target_block,
                        num_cores)

    if n_main == n:
        main = x.reshape(rows, cols)          # free logical reshape
        flat = None
    else:
        flat = x.reshape(-1)
        main = flat[:n_main].reshape(rows, cols)

    out_main = pl.pallas_call(
        _swish_kernel,
        out_shape=jax.ShapeDtypeStruct((rows, cols), dtype),
        grid_spec=pltpu.PrefetchScalarGridSpec(
            num_scalar_prefetch=0,
            grid=(rows // tr,),
            in_specs=[pl.BlockSpec((tr, cols), lambda i: (i, 0))],
            out_specs=pl.BlockSpec((tr, cols), lambda i: (i, 0)),
        ),
        compiler_params=pltpu.CompilerParams(
            dimension_semantics=("parallel",),
            vmem_limit_bytes=vmem_limit,
        ),
    )(main)

    if n_main == n:
        return out_main.reshape(orig_shape)
    # Rare unaligned remainder (< sub*128 elements): plain jnp, then stitch.
    tail_out = _swish_jnp(flat[n_main:])
    return jnp.concatenate([out_main.reshape(-1), tail_out]).reshape(orig_shape)


if __name__ == "__main__":
    key = jax.random.PRNGKey(0)
    x = jax.random.normal(key, (2, 4, 16, 16), dtype=jnp.float32)
    y_ref = x * jax.nn.sigmoid(x)

    # Exercise the Pallas kernel on the bundled (small) shape.
    y = swish(x, force_pallas=True)
    jax.block_until_ready(y)
    assert y.shape == x.shape and y.dtype == x.dtype
    assert jnp.allclose(y, y_ref, atol=1e-6, rtol=1e-6)

    # Default path (tiny input -> fused XLA elementwise) must agree too.
    y_small = swish(x)
    assert jnp.allclose(y_small, y_ref, atol=1e-6, rtol=1e-6)

    # Unaligned element count exercises the aligned-prefix + jnp-tail path.
    x_odd = jax.random.normal(jax.random.PRNGKey(1), (3, 5, 7, 11),
                              dtype=jnp.float32)
    y_odd = swish(x_odd, force_pallas=True)
    jax.block_until_ready(y_odd)
    assert jnp.allclose(y_odd, x_odd * jax.nn.sigmoid(x_odd),
                        atol=1e-6, rtol=1e-6)

    print("KERNEL_OK")
</pallas_src>

<mosaic_0001>
module attributes {stable_mosaic.version = 11 : i64} {
  func.func @_swish_kernel(%arg0: i32, %arg1: memref<8x256xf32, #tpu.memory_space<vmem>>, %arg2: memref<8x256xf32, #tpu.memory_space<vmem>>) attributes {dimension_semantics = [#tpu.dimension_semantics<parallel>], iteration_bounds = array<i64: 1>, scalar_prefetch = 0 : i64, scratch_operands = 0 : i64, tpu.core_type = #tpu.core_type<tc>, window_params = [{transform_indices = @transform_0, window_bounds = array<i64: 8, 256>}, {transform_indices = @transform_1, window_bounds = array<i64: 8, 256>}]} {
    %c0 = arith.constant 0 : index
    %c0_0 = arith.constant 0 : index
    %0 = vector.load %arg1[%c0, %c0_0] : memref<8x256xf32, #tpu.memory_space<vmem>>, vector<8x256xf32>
    %1 = arith.negf %0 : vector<8x256xf32>
    %2 = math.exp %1 : vector<8x256xf32>
    %cst = arith.constant 1.000000e+00 : f32
    %3 = vector.broadcast %cst : f32 to vector<8x256xf32>
    %4 = arith.addf %3, %2 : vector<8x256xf32>
    %5 = arith.divf %3, %4 : vector<8x256xf32>
    %6 = arith.mulf %0, %5 : vector<8x256xf32>
    %c0_1 = arith.constant 0 : index
    %c0_2 = arith.constant 0 : index
    %7 = vector.load %arg2[%c0_1, %c0_2] : memref<8x256xf32, #tpu.memory_space<vmem>>, vector<8x256xf32>
    tpu.vector_store %arg2[%c0_1, %c0_2], %6 {strides = array<i32>} : memref<8x256xf32, #tpu.memory_space<vmem>>, vector<8x256xf32>,
    return
  }
  func.func @transform_0(%arg0: i32) -> (i32, i32) {
    %c0_i32 = arith.constant 0 : i32
    %c0_i32_0 = arith.constant 0 : i32
    return %arg0, %c0_i32 : i32, i32
  }
  func.func @transform_1(%arg0: i32) -> (i32, i32) {
    %c0_i32 = arith.constant 0 : i32
    %c0_i32_0 = arith.constant 0 : i32
    return %arg0, %c0_i32 : i32, i32
  }
}

</mosaic_0001>

<llo_original>
// kernel: tpu_custom_call.1
$region0: #{tpu_custom_call.1}
  #allocation0 [shape = 'u32[]', space=smem, size = 0x4, offset = 0x4, fixed_abs, tag = 'smem constant byte address 0x4 - core index']
  #allocation1 [shape = 'u32[144,128]{1,0:T(1,128)}', space=vmem, size = 0x12000, scoped, tag = 'internal scratch']
  %s0 = inlined_call_operand.hbm [shape: f32[8,256], index: 0, kind: input, shape index: {}]
  %s1 = inlined_call_operand.hbm [shape: f32[8,256], index: 1, kind: output, shape index: {}]
  %s2 = sld [smem:[#allocation0]]
  $region18: #{tpu_custom_call.1} parent=0
    _
  %s4 = ssub.s32 1, %s2
  %s5 = scalar_select 0, %s4, %s2
  $region1: #{tpu_custom_call.1} parent=0
    #allocation2 [shape = 'u8[8192]{0}', space=vmem, size = 0x2000, scoped, tag = 'input window, operand 0, single buffered']
    #allocation3 [shape = 's32[1]{0}', space=sflag, size = 0x4, scoped, tag = 'scoped memory for tpu_custom_call.1']
    #allocation4 [shape = 's32[1]{0}', space=sflag, size = 0x4, scoped, tag = 'scoped memory for tpu_custom_call.1']
    #allocation5 [shape = 'u8[8192]{0}', space=vmem, size = 0x2000, scoped, tag = 'output window, operand 0, single buffered']
    %6 = vsyncpa [#allocation3], 0
    %7 = vsyncpa [#allocation4], 0
    // Predicated region
    $region2: #{tpu_custom_call.1} parent=1 // pred_check
      _
    $region3: #{tpu_custom_call.1} parent=1 // pred_check_branch
      %9 = sbr.rel (0) target = $region5
    $region4: #{tpu_custom_call.1} parent=1 // pred_region
      %s11 = ssub.s32 256, 256
      %12 = vsyncadd [#allocation3], %s11
      %s14 = sshll.u32 [#allocation2], 4
      %s15 = int_to_ptr.vmem [resolvable:$true] %s14
      %17 = dma.hbm_to_vmem [thread:$0]  %s0, 256, %s15, [#allocation3]
    $region5: #{tpu_custom_call.1} parent=1 // pred_fallthru
      _
    // Predicated region
    $region6: #{tpu_custom_call.1} parent=1 // pred_check
      _
    $region7: #{tpu_custom_call.1} parent=1 // pred_check_branch
      %19 = sbr.rel (0) target = $region9
    $region8: #{tpu_custom_call.1} parent=1 // pred_region
      %20 = dma.done [#allocation3], 256
    $region9: #{tpu_custom_call.1} parent=1 // pred_fallthru
      _
    %v21 = vld [vmem:[#allocation2] sm:$0xff]
    %v22 = vld [vmem:[#allocation2 + $0x8] sm:$0xff]
    %v23 = vxor.u32 %v21, 2147483648
    %v24 = vxor.u32 %v22, 2147483648
    %v25 = vmul.f32 %v23, 1.442695
    %v26 = vpow.pop %v25
    %v27 = vmul.f32 %v24, 1.442695
    %v28 = vpow.pop %v27
    %v29 = vadd.f32 %v26, 1.0
    %v30 = vadd.f32 %v28, 1.0
    %v31 = vrcp.pop %v29
    %v32 = vmul.f32 1.0, %v31
    %v33 = vrcp.pop %v30
    %v34 = vmul.f32 1.0, %v33
    %v35 = vmul.f32 %v21, %v32
    %v36 = vmul.f32 %v22, %v34
    %37 = vst [vmem:[#allocation5] sm:$0xff] %v35
    %38 = vst [vmem:[#allocation5 + $0x8] sm:$0xff] %v36
    // Predicated region
    $region10: #{tpu_custom_call.1} parent=1 // pred_check
      _
    $region11: #{tpu_custom_call.1} parent=1 // pred_check_branch
      %40 = sbr.rel (0) target = $region13
    $region12: #{tpu_custom_call.1} parent=1 // pred_region
      %s42 = ssub.s32 256, 256
      %43 = vsyncadd [#allocation4], %s42
      %s45 = sshll.u32 [#allocation5], 4
      %s46 = int_to_ptr.vmem [resolvable:$true] %s45
      %48 = dma.vmem_to_hbm [thread:$0]  %s46, 256, %s1, [#allocation4]
    $region13: #{tpu_custom_call.1} parent=1 // pred_fallthru
      _
    // Predicated region
    $region14: #{tpu_custom_call.1} parent=1 // pred_check
      _
    $region15: #{tpu_custom_call.1} parent=1 // pred_check_branch
      %50 = sbr.rel (0) target = $region17
    $region16: #{tpu_custom_call.1} parent=1 // pred_region
      %51 = dma.done [#allocation4], 256
    $region17: #{tpu_custom_call.1} parent=1 // pred_fallthru
      _
    %52 = vsyncpa [#allocation3], 1
    %53 = vsyncpa [#allocation4], 1

</llo_original>
